<compile_context>
chip_gen: v7x
topology: tpu7x:2x2x1
jax: 0.10.0
libtpu: 0.0.40
codegen_flags: <defaults>
</compile_context>

<pallas_src>
import jax
import jax.numpy as jnp
from jax.experimental import pallas as pl
from jax.experimental.pallas import tpu as pltpu

P1 = 1            # module's self.p1
DROP_P = 0.5      # torch.nn.functional.dropout default (training=True)


def _int_pow(x, p):
    """Small-integer power via repeated multiplies (never exp/log).  Identity for p == 1."""
    if p == 1:
        return x
    r = x
    for _ in range(p - 1):
        r = r * x
    return r


def pow_dropout_kernel(x_ref, u_ref, o_ref):
    # x_ref / u_ref / o_ref: full-array VMEM refs, shape (1, 2, 2) float32.
    x = x_ref[...]
    xp = _int_pow(x, P1)                                  # x2 = x1 ** p1 (identity for p1 == 1)

    # dropout(p): keep with prob (1 - p), scale kept elements by 1 / (1 - p)
    keep = u_ref[...] >= jnp.float32(DROP_P)              # P(keep) = 1 - DROP_P
    scale = jnp.float32(1.0 / (1.0 - DROP_P))
    o_ref[...] = jnp.where(keep, xp * scale, jnp.float32(0.0))


def m2_forward(x1, key):
    """Pallas implementation of m2.forward: (x1 ** p1) -> dropout(p=0.5, training)."""
    # Uniform randoms for the dropout mask (kernel-portable; see header comment).
    u = jax.random.uniform(key, x1.shape, dtype=jnp.float32)

    out = pl.pallas_call(
        pow_dropout_kernel,
        out_shape=jax.ShapeDtypeStruct(x1.shape, x1.dtype),
        in_specs=[
            pl.BlockSpec(memory_space=pltpu.MemorySpace.VMEM),   # x1
            pl.BlockSpec(memory_space=pltpu.MemorySpace.VMEM),   # uniform randoms
        ],
        out_specs=pl.BlockSpec(memory_space=pltpu.MemorySpace.VMEM),
        input_output_aliases={0: 0},   # kernel fully overwrites x1's buffer
    )(x1, u)

    # TODO(synk): x3 = torch.randint(0, 9, (1,)) in the original module is
    # computed but never used, so it is intentionally omitted here.
    return out


if __name__ == "__main__":
    root = jax.random.PRNGKey(0)
    k_x, k_drop = jax.random.split(root)

    x1 = jax.random.normal(k_x, (1, 2, 2), dtype=jnp.float32)

    out = m2_forward(x1, k_drop)
    jax.block_until_ready(out)

    assert out.shape == (1, 2, 2)
    assert out.dtype == jnp.float32
    print("KERNEL_OK")
</pallas_src>

<mosaic_0001>
module attributes {stable_mosaic.version = 11 : i64} {
  func.func @pow_dropout_kernel(%arg0: memref<1x2x2xf32, #tpu.memory_space<vmem>>, %arg1: memref<1x2x2xf32, #tpu.memory_space<vmem>>, %arg2: memref<1x2x2xf32, #tpu.memory_space<vmem>>) attributes {dimension_semantics = [], scalar_prefetch = 0 : i64, scratch_operands = 0 : i64, tpu.core_type = #tpu.core_type<tc>} {
    %c0 = arith.constant 0 : index
    %c0_0 = arith.constant 0 : index
    %c0_1 = arith.constant 0 : index
    %0 = vector.load %arg0[%c0, %c0_0, %c0_1] : memref<1x2x2xf32, #tpu.memory_space<vmem>>, vector<1x2x2xf32>
    %c0_2 = arith.constant 0 : index
    %c0_3 = arith.constant 0 : index
    %c0_4 = arith.constant 0 : index
    %1 = vector.load %arg1[%c0_2, %c0_3, %c0_4] : memref<1x2x2xf32, #tpu.memory_space<vmem>>, vector<1x2x2xf32>
    %cst = arith.constant 5.000000e-01 : f32
    %2 = vector.broadcast %cst : f32 to vector<1x2x2xf32>
    %3 = arith.cmpf oge, %1, %2 : vector<1x2x2xf32>
    %cst_5 = arith.constant 2.000000e+00 : f32
    %4 = vector.broadcast %cst_5 : f32 to vector<1x2x2xf32>
    %5 = arith.mulf %0, %4 : vector<1x2x2xf32>
    %cst_6 = arith.constant 0.000000e+00 : f32
    %6 = vector.broadcast %cst_6 : f32 to vector<1x2x2xf32>
    %7 = arith.select %3, %5, %6 : vector<1x2x2xi1>, vector<1x2x2xf32>
    %c0_7 = arith.constant 0 : index
    %c0_8 = arith.constant 0 : index
    %c0_9 = arith.constant 0 : index
    %8 = vector.load %arg2[%c0_7, %c0_8, %c0_9] : memref<1x2x2xf32, #tpu.memory_space<vmem>>, vector<1x2x2xf32>
    tpu.vector_store %arg2[%c0_7, %c0_8, %c0_9], %7 {strides = array<i32>} : memref<1x2x2xf32, #tpu.memory_space<vmem>>, vector<1x2x2xf32>,
    return
  }
}

</mosaic_0001>

<llo_original>
// kernel: tpu_custom_call.1
$region0: #{tpu_custom_call.1}
  #allocation0 [shape = 'u32[]', space=smem, size = 0x4, offset = 0x4, fixed_abs, tag = 'smem constant byte address 0x4 - core index']
  #allocation1 [shape = 'u32[144,128]{1,0:T(1,128)}', space=vmem, size = 0x12000, scoped, tag = 'internal scratch']
  %s0 = inlined_call_operand.hbm [shape: f32[1,2,2], index: 0, kind: input, shape index: {}, may-alias: {0,2}]
  %s1 = inlined_call_operand.vmem [shape: f32[1,2,2], index: 1, kind: input, shape index: {}]
  %s2 = inlined_call_operand.hbm [shape: f32[1,2,2], index: 2, kind: output, shape index: {}, may-alias: {0,2}]
  %s3 = sld [smem:[#allocation0]]
  $region22: #{tpu_custom_call.1} parent=0
    _
  %s5 = ssub.s32 1, %s3
  %s6 = scalar_select 0, %s5, %s3
  $region1: #{tpu_custom_call.1} parent=0
    #allocation2 [shape = 'u8[1024]{0}', space=vmem, size = 0x400, scoped, tag = 'input window, operand 0, single buffered']
    #allocation3 [shape = 's32[1]{0}', space=sflag, size = 0x4, scoped, tag = 'scoped memory for tpu_custom_call.1']
    #allocation4 [shape = 's32[1]{0}', space=sflag, size = 0x4, scoped, tag = 'scoped memory for tpu_custom_call.1']
    #allocation5 [shape = 'u8[1024]{0}', space=vmem, size = 0x400, scoped, tag = 'output window, operand 0, single buffered']
    %7 = vsyncpa [#allocation3], 0
    %8 = vsyncpa [#allocation4], 0
    // Predicated region
    $region2: #{tpu_custom_call.1} parent=1 // pred_check
      _
    $region3: #{tpu_custom_call.1} parent=1 // pred_check_branch
      %10 = sbr.rel (0) target = $region5
    $region4: #{tpu_custom_call.1} parent=1 // pred_region
      %s12 = ssub.s32 32, 32
      %13 = vsyncadd [#allocation3], %s12
      %s15 = sshll.u32 [#allocation2], 4
      %s16 = int_to_ptr.vmem [resolvable:$true] %s15
      %18 = dma.hbm_to_vmem [thread:$0]  %s0, 32, %s16, [#allocation3]
    $region5: #{tpu_custom_call.1} parent=1 // pred_fallthru
      _
    // Predicated region
    $region6: #{tpu_custom_call.1} parent=1 // pred_check
      _
    $region7: #{tpu_custom_call.1} parent=1 // pred_check_branch
      %20 = sbr.rel (0) target = $region9
    $region8: #{tpu_custom_call.1} parent=1 // pred_region
      _
    $region9: #{tpu_custom_call.1} parent=1 // pred_fallthru
      _
    // Predicated region
    $region10: #{tpu_custom_call.1} parent=1 // pred_check
      _
    $region11: #{tpu_custom_call.1} parent=1 // pred_check_branch
      %22 = sbr.rel (0) target = $region13
    $region12: #{tpu_custom_call.1} parent=1 // pred_region
      %23 = dma.done [#allocation3], 32
    $region13: #{tpu_custom_call.1} parent=1 // pred_fallthru
      _
    %v24 = vld [vmem:[#allocation2] sm:$0x3]
    %v25 = vld [vmem:[%s1] sm:$0x3]
    %vm26 = vcmp.ge.f32.partialorder %v25, 0.5
    %v27 = vmul.f32 %v24, 2.0
    %v28 = vsel %vm26, %v27, 0.0
    %vm29 = vcmask 9216
    %30 = vst.msk [vmem:[#allocation5] sm:$0x3] %vm29, %v28
    // Predicated region
    $region14: #{tpu_custom_call.1} parent=1 // pred_check
      _
    $region15: #{tpu_custom_call.1} parent=1 // pred_check_branch
      %32 = sbr.rel (0) target = $region17
    $region16: #{tpu_custom_call.1} parent=1 // pred_region
      %s34 = ssub.s32 32, 32
      %35 = vsyncadd [#allocation4], %s34
      %s37 = sshll.u32 [#allocation5], 4
      %s38 = int_to_ptr.vmem [resolvable:$true] %s37
      %40 = dma.vmem_to_hbm [thread:$0]  %s38, 32, %s2, [#allocation4]
    $region17: #{tpu_custom_call.1} parent=1 // pred_fallthru
      _
    // Predicated region
    $region18: #{tpu_custom_call.1} parent=1 // pred_check
      _
    $region19: #{tpu_custom_call.1} parent=1 // pred_check_branch
      %42 = sbr.rel (0) target = $region21
    $region20: #{tpu_custom_call.1} parent=1 // pred_region
      %43 = dma.done [#allocation4], 32
    $region21: #{tpu_custom_call.1} parent=1 // pred_fallthru
      _
    %44 = vsyncpa [#allocation3], 1
    %45 = vsyncpa [#allocation4], 1

</llo_original>
